<compile_context>
chip_gen: v7x
topology: tpu7x:2x2x1
jax: 0.10.0
libtpu: 0.0.40
codegen_flags: <defaults>
</compile_context>

<pallas_src>
import jax
import jax.numpy as jnp
from jax.experimental import pallas as pl
from jax.experimental.pallas import tpu as pltpu

MIN_VAL = -1000000.0  # self.MIN in the PyTorch module


def _max_pooling_kernel(x_ref, mask_ref, out_ref):
    # x_ref:    (tile_items, S, tile_d)
    # mask_ref: (tile_items, S)  float {0., 1.}
    # out_ref:  (tile_items, tile_d)
    x = x_ref[...].astype(jnp.float32)
    mask = mask_ref[...]

    min_f = jnp.float32(MIN_VAL)
    # masked_fill_(empty_mask, MIN): broadcast mask over the feature (lane) axis
    masked = jnp.where(mask[:, :, None] == 0.0, min_f, x)

    # max over the sub-item axis (sublane reduction)
    pooled = jnp.max(masked, axis=1)  # (tile_items, tile_d)

    # rows that were fully masked produce exactly MIN -> zero them out
    pooled = jnp.where(pooled == min_f, jnp.float32(0.0), pooled)

    out_ref[...] = pooled.astype(out_ref.dtype)


def _round_up(a, b):
    return ((a + b - 1) // b) * b


def _choose_tiles(N, S, D, itemsize, vmem_block_budget=4 * 1024 * 1024):
    """Pick (tile_items, tile_d) so one x block fits comfortably in VMEM."""
    # Feature tile: a multiple of 128 that divides D, else keep D whole
    # (block dim == full array dim is always legal).
    if D % 128 == 0:
        tile_d = min(D, 2048)
        tile_d -= tile_d % 128
        while D % tile_d:
            tile_d -= 128
    else:
        tile_d = D

    # Item tile: largest multiple of 8 whose x block stays under the budget.
    per_item_bytes = max(S * tile_d * itemsize, 1)
    max_items = max(vmem_block_budget // per_item_bytes, 8)
    max_items -= max_items % 8
    tile_items = max(min(max_items, _round_up(N, 8)), 8)
    return tile_items, tile_d


def max_pooling_forward(x, x_mask):
    """Pallas equivalent of MaxPooling.forward.

    x:      (N, S, D) float
    x_mask: (N, S)    int/float, nonzero = valid
    returns (N, D) with the same dtype as x
    """
    N, S, D = x.shape
    itemsize = jnp.dtype(x.dtype).itemsize
    tile_items, tile_d = _choose_tiles(N, S, D, itemsize)

    mask_f = x_mask.astype(jnp.float32)

    # Pad the item axis so it divides evenly into tiles.  Padded rows are
    # fully masked, so they pool to 0 and are sliced off below.
    n_pad = (-N) % tile_items
    if n_pad:
        x = jnp.pad(x, ((0, n_pad), (0, 0), (0, 0)))
        mask_f = jnp.pad(mask_f, ((0, n_pad), (0, 0)))
    n_padded = N + n_pad

    grid = (n_padded // tile_items, D // tile_d)

    out = pl.pallas_call(
        _max_pooling_kernel,
        out_shape=jax.ShapeDtypeStruct((n_padded, D), x.dtype),
        grid_spec=pltpu.PrefetchScalarGridSpec(
            num_scalar_prefetch=0,
            grid=grid,
            in_specs=[
                pl.BlockSpec((tile_items, S, tile_d), lambda i, j: (i, 0, j)),
                pl.BlockSpec((tile_items, S), lambda i, j: (i, 0)),
            ],
            out_specs=pl.BlockSpec((tile_items, tile_d), lambda i, j: (i, j)),
        ),
        compiler_params=pltpu.CompilerParams(
            dimension_semantics=("parallel", "parallel"),
        ),
    )(x, mask_f)

    return out[:N]


def _reference_forward(x, x_mask):
    """Pure-JAX reference mirroring the PyTorch forward."""
    empty = (x_mask == 0)[:, :, None]
    x_now = jnp.where(empty, MIN_VAL, x)
    x_out = jnp.max(x_now, axis=1)
    return jnp.where(x_out == MIN_VAL, 0.0, x_out)


if __name__ == "__main__":
    key = jax.random.PRNGKey(0)
    kx, km = jax.random.split(key, 2)

    # small shapes: 10 items, 8 sub-items, 128 features (lane-dense last dim)
    N, S, D = 10, 8, 128
    x = jax.random.normal(kx, (N, S, D), dtype=jnp.float32)
    x_mask = (jax.random.uniform(km, (N, S)) > 0.3).astype(jnp.int32)
    x_mask = x_mask.at[:, 0].set(1)   # most rows have at least one valid item
    x_mask = x_mask.at[3, :].set(0)   # one fully-masked row -> must pool to 0

    out = max_pooling_forward(x, x_mask)
    out = jax.block_until_ready(out)

    ref = _reference_forward(x, x_mask)
    assert out.shape == (N, D)
    assert jnp.allclose(out, ref, atol=1e-6, rtol=1e-6), "mismatch vs reference"
    assert jnp.all(out[3] == 0.0), "fully-masked row must be zero"

    print("KERNEL_OK")
</pallas_src>

<mosaic_0001>
module attributes {stable_mosaic.version = 11 : i64} {
  func.func @_max_pooling_kernel(%arg0: i32, %arg1: i32, %arg2: memref<16x8x128xf32, #tpu.memory_space<vmem>>, %arg3: memref<16x8xf32, #tpu.memory_space<vmem>>, %arg4: memref<16x128xf32, #tpu.memory_space<vmem>>) attributes {dimension_semantics = [#tpu.dimension_semantics<parallel>, #tpu.dimension_semantics<parallel>], iteration_bounds = array<i64: 1, 1>, scalar_prefetch = 0 : i64, scratch_operands = 0 : i64, tpu.core_type = #tpu.core_type<tc>, window_params = [{transform_indices = @transform_0, window_bounds = array<i64: 16, 8, 128>}, {transform_indices = @transform_1, window_bounds = array<i64: 16, 8>}, {transform_indices = @transform_2, window_bounds = array<i64: 16, 128>}]} {
    %c0 = arith.constant 0 : index
    %c0_0 = arith.constant 0 : index
    %c0_1 = arith.constant 0 : index
    %0 = vector.load %arg2[%c0, %c0_0, %c0_1] : memref<16x8x128xf32, #tpu.memory_space<vmem>>, vector<16x8x128xf32>
    %c0_2 = arith.constant 0 : index
    %c0_3 = arith.constant 0 : index
    %1 = vector.load %arg3[%c0_2, %c0_3] : memref<16x8xf32, #tpu.memory_space<vmem>>, vector<16x8xf32>
    %2 = vector.shape_cast %1 : vector<16x8xf32> to vector<16x8x1xf32>
    %cst = arith.constant 0.000000e+00 : f32
    %3 = vector.broadcast %cst : f32 to vector<16x8x1xf32>
    %4 = arith.cmpf oeq, %2, %3 : vector<16x8x1xf32>
    %cst_4 = arith.constant -1.000000e+06 : f32
    %5 = vector.shape_cast %4 : vector<16x8x1xi1> to vector<16x8x1xi1>
    %6 = vector.broadcast %5 : vector<16x8x1xi1> to vector<16x8x128xi1>
    %7 = vector.broadcast %cst_4 : f32 to vector<16x8x128xf32>
    %8 = arith.select %6, %7, %0 : vector<16x8x128xi1>, vector<16x8x128xf32>
    %cst_5 = arith.constant dense<0xFF800000> : vector<16x128xf32>
    %9 = vector.multi_reduction <maximumf>, %8, %cst_5 [1] : vector<16x8x128xf32> to vector<16x128xf32>
    %cst_6 = arith.constant -1.000000e+06 : f32
    %10 = vector.broadcast %cst_6 : f32 to vector<16x128xf32>
    %11 = arith.cmpf oeq, %9, %10 : vector<16x128xf32>
    %cst_7 = arith.constant 0.000000e+00 : f32
    %12 = vector.broadcast %cst_7 : f32 to vector<16x128xf32>
    %13 = arith.select %11, %12, %9 : vector<16x128xi1>, vector<16x128xf32>
    %c0_8 = arith.constant 0 : index
    %c0_9 = arith.constant 0 : index
    %14 = vector.load %arg4[%c0_8, %c0_9] : memref<16x128xf32, #tpu.memory_space<vmem>>, vector<16x128xf32>
    tpu.vector_store %arg4[%c0_8, %c0_9], %13 {strides = array<i32>} : memref<16x128xf32, #tpu.memory_space<vmem>>, vector<16x128xf32>,
    return
  }
  func.func @transform_0(%arg0: i32, %arg1: i32) -> (i32, i32, i32) {
    %c0_i32 = arith.constant 0 : i32
    %c0_i32_0 = arith.constant 0 : i32
    return %arg0, %c0_i32, %arg1 : i32, i32, i32
  }
  func.func @transform_1(%arg0: i32, %arg1: i32) -> (i32, i32) {
    %c0_i32 = arith.constant 0 : i32
    %c0_i32_0 = arith.constant 0 : i32
    return %arg0, %c0_i32 : i32, i32
  }
  func.func @transform_2(%arg0: i32, %arg1: i32) -> (i32, i32) {
    %c0_i32 = arith.constant 0 : i32
    return %arg0, %arg1 : i32, i32
  }
}

</mosaic_0001>

<llo_original>
// kernel: tpu_custom_call.1
$region0: #{tpu_custom_call.1}
  #allocation0 [shape = 'u32[]', space=smem, size = 0x4, offset = 0x4, fixed_abs, tag = 'smem constant byte address 0x4 - core index']
  #allocation1 [shape = 'u32[144,128]{1,0:T(1,128)}', space=vmem, size = 0x12000, scoped, tag = 'internal scratch']
  %s0 = inlined_call_operand.hbm [shape: f32[16,8,128], index: 0, kind: input, shape index: {}]
  %s1 = inlined_call_operand.vmem [shape: f32[16,8], index: 1, kind: input, shape index: {}]
  %s2 = inlined_call_operand.hbm [shape: f32[16,128], index: 2, kind: output, shape index: {}]
  %s3 = sld [smem:[#allocation0]]
  $region22: #{tpu_custom_call.1} parent=0
    _
  %s5 = ssub.s32 1, %s3
  %s6 = scalar_select 0, %s5, %s3
  $region1: #{tpu_custom_call.1} parent=0
    #allocation2 [shape = 'u8[65536]{0}', space=vmem, size = 0x10000, scoped, tag = 'input window, operand 0, single buffered']
    #allocation3 [shape = 's32[1]{0}', space=sflag, size = 0x4, scoped, tag = 'scoped memory for tpu_custom_call.1']
    #allocation4 [shape = 's32[1]{0}', space=sflag, size = 0x4, scoped, tag = 'scoped memory for tpu_custom_call.1']
    #allocation5 [shape = 'u8[8192]{0}', space=vmem, size = 0x2000, scoped, tag = 'output window, operand 0, single buffered']
    %7 = vsyncpa [#allocation3], 0
    %8 = vsyncpa [#allocation4], 0
    // Predicated region
    $region2: #{tpu_custom_call.1} parent=1 // pred_check
      _
    $region3: #{tpu_custom_call.1} parent=1 // pred_check_branch
      %10 = sbr.rel (0) target = $region5
    $region4: #{tpu_custom_call.1} parent=1 // pred_region
      %s12 = ssub.s32 2048, 2048
      %13 = vsyncadd [#allocation3], %s12
      %s14 = sshll.u32 [#allocation2], 4
      %s15 = int_to_ptr.vmem [resolvable:$true] %s14
      %20 = dma.hbm_to_vmem [thread:$0]  %s0, 2048, %s15, [#allocation3], 128, 128, 8
    $region5: #{tpu_custom_call.1} parent=1 // pred_fallthru
      _
    // Predicated region
    $region6: #{tpu_custom_call.1} parent=1 // pred_check
      _
    $region7: #{tpu_custom_call.1} parent=1 // pred_check_branch
      %22 = sbr.rel (0) target = $region9
    $region8: #{tpu_custom_call.1} parent=1 // pred_region
      _
    $region9: #{tpu_custom_call.1} parent=1 // pred_fallthru
      _
    // Predicated region
    $region10: #{tpu_custom_call.1} parent=1 // pred_check
      _
    $region11: #{tpu_custom_call.1} parent=1 // pred_check_branch
      %24 = sbr.rel (0) target = $region13
    $region12: #{tpu_custom_call.1} parent=1 // pred_region
      %25 = dma.done [#allocation3], 2048
    $region13: #{tpu_custom_call.1} parent=1 // pred_fallthru
      _
    %v26 = vld [vmem:[#allocation2] sm:$0xff]
    %v27 = vld [vmem:[#allocation2 + $0x8] sm:$0xff]
    %v28 = vld [vmem:[#allocation2 + $0x10] sm:$0xff]
    %v29 = vld [vmem:[#allocation2 + $0x18] sm:$0xff]
    %v30 = vld [vmem:[#allocation2 + $0x20] sm:$0xff]
    %v31 = vld [vmem:[#allocation2 + $0x28] sm:$0xff]
    %v32 = vld [vmem:[#allocation2 + $0x30] sm:$0xff]
    %v33 = vld [vmem:[#allocation2 + $0x38] sm:$0xff]
    %v34 = vld [vmem:[#allocation2 + $0x40] sm:$0xff]
    %v35 = vld [vmem:[#allocation2 + $0x48] sm:$0xff]
    %v36 = vld [vmem:[#allocation2 + $0x50] sm:$0xff]
    %v37 = vld [vmem:[#allocation2 + $0x58] sm:$0xff]
    %v38 = vld [vmem:[#allocation2 + $0x60] sm:$0xff]
    %v39 = vld [vmem:[#allocation2 + $0x68] sm:$0xff]
    %v40 = vld [vmem:[#allocation2 + $0x70] sm:$0xff]
    %v41 = vld [vmem:[#allocation2 + $0x78] sm:$0xff]
    %v42 = vld [vmem:[%s1] sm:$0xff]
    %v43 = vld [vmem:[%s1 + $0x8] sm:$0xff]
    %v44 = vlaneseq
    %v45 = vshrl.u32 %v44, 7
    %v46 = vsub.s32 0, %v45
    %v47 = vrot.slane %v42, %v46
    %49 = vbcast.lane.b32.xlu0 %v47, 256
    %v50 = vpop.permute.xlu0 %49
    %v51 = vlaneseq
    %v52 = vshrl.u32 %v51, 7
    %v53 = vsub.s32 1, %v52
    %v54 = vrot.slane %v42, %v53
    %56 = vbcast.lane.b32.xlu0 %v54, 256
    %v57 = vpop.permute.xlu0 %56
    %v58 = vlaneseq
    %v59 = vshrl.u32 %v58, 7
    %v60 = vsub.s32 2, %v59
    %v61 = vrot.slane %v42, %v60
    %63 = vbcast.lane.b32.xlu0 %v61, 256
    %v64 = vpop.permute.xlu0 %63
    %v65 = vlaneseq
    %v66 = vshrl.u32 %v65, 7
    %v67 = vsub.s32 3, %v66
    %v68 = vrot.slane %v42, %v67
    %70 = vbcast.lane.b32.xlu0 %v68, 256
    %v71 = vpop.permute.xlu0 %70
    %v72 = vlaneseq
    %v73 = vshrl.u32 %v72, 7
    %v74 = vsub.s32 4, %v73
    %v75 = vrot.slane %v42, %v74
    %77 = vbcast.lane.b32.xlu0 %v75, 256
    %v78 = vpop.permute.xlu0 %77
    %v79 = vlaneseq
    %v80 = vshrl.u32 %v79, 7
    %v81 = vsub.s32 5, %v80
    %v82 = vrot.slane %v42, %v81
    %84 = vbcast.lane.b32.xlu0 %v82, 256
    %v85 = vpop.permute.xlu0 %84
    %v86 = vlaneseq
    %v87 = vshrl.u32 %v86, 7
    %v88 = vsub.s32 6, %v87
    %v89 = vrot.slane %v42, %v88
    %91 = vbcast.lane.b32.xlu0 %v89, 256
    %v92 = vpop.permute.xlu0 %91
    %v93 = vlaneseq
    %v94 = vshrl.u32 %v93, 7
    %v95 = vsub.s32 7, %v94
    %v96 = vrot.slane %v42, %v95
    %98 = vbcast.lane.b32.xlu0 %v96, 256
    %v99 = vpop.permute.xlu0 %98
    %v100 = vlaneseq
    %v101 = vshrl.u32 %v100, 7
    %v102 = vsub.s32 0, %v101
    %v103 = vrot.slane %v43, %v102
    %105 = vbcast.lane.b32.xlu0 %v103, 256
    %v106 = vpop.permute.xlu0 %105
    %v107 = vlaneseq
    %v108 = vshrl.u32 %v107, 7
    %v109 = vsub.s32 1, %v108
    %v110 = vrot.slane %v43, %v109
    %112 = vbcast.lane.b32.xlu0 %v110, 256
    %v113 = vpop.permute.xlu0 %112
    %v114 = vlaneseq
    %v115 = vshrl.u32 %v114, 7
    %v116 = vsub.s32 2, %v115
    %v117 = vrot.slane %v43, %v116
    %119 = vbcast.lane.b32.xlu0 %v117, 256
    %v120 = vpop.permute.xlu0 %119
    %v121 = vlaneseq
    %v122 = vshrl.u32 %v121, 7
    %v123 = vsub.s32 3, %v122
    %v124 = vrot.slane %v43, %v123
    %126 = vbcast.lane.b32.xlu0 %v124, 256
    %v127 = vpop.permute.xlu0 %126
    %v128 = vlaneseq
    %v129 = vshrl.u32 %v128, 7
    %v130 = vsub.s32 4, %v129
    %v131 = vrot.slane %v43, %v130
    %133 = vbcast.lane.b32.xlu0 %v131, 256
    %v134 = vpop.permute.xlu0 %133
    %v135 = vlaneseq
    %v136 = vshrl.u32 %v135, 7
    %v137 = vsub.s32 5, %v136
    %v138 = vrot.slane %v43, %v137
    %140 = vbcast.lane.b32.xlu0 %v138, 256
    %v141 = vpop.permute.xlu0 %140
    %v142 = vlaneseq
    %v143 = vshrl.u32 %v142, 7
    %v144 = vsub.s32 6, %v143
    %v145 = vrot.slane %v43, %v144
    %147 = vbcast.lane.b32.xlu0 %v145, 256
    %v148 = vpop.permute.xlu0 %147
    %v149 = vlaneseq
    %v150 = vshrl.u32 %v149, 7
    %v151 = vsub.s32 7, %v150
    %v152 = vrot.slane %v43, %v151
    %154 = vbcast.lane.b32.xlu0 %v152, 256
    %v155 = vpop.permute.xlu0 %154
    %vm156 = vcmp.eq.f32.partialorder %v50, 0.0
    %vm157 = vcmp.eq.f32.partialorder %v57, 0.0
    %vm158 = vcmp.eq.f32.partialorder %v64, 0.0
    %vm159 = vcmp.eq.f32.partialorder %v71, 0.0
    %vm160 = vcmp.eq.f32.partialorder %v78, 0.0
    %vm161 = vcmp.eq.f32.partialorder %v85, 0.0
    %vm162 = vcmp.eq.f32.partialorder %v92, 0.0
    %vm163 = vcmp.eq.f32.partialorder %v99, 0.0
    %vm164 = vcmp.eq.f32.partialorder %v106, 0.0
    %vm165 = vcmp.eq.f32.partialorder %v113, 0.0
    %vm166 = vcmp.eq.f32.partialorder %v120, 0.0
    %vm167 = vcmp.eq.f32.partialorder %v127, 0.0
    %vm168 = vcmp.eq.f32.partialorder %v134, 0.0
    %vm169 = vcmp.eq.f32.partialorder %v141, 0.0
    %vm170 = vcmp.eq.f32.partialorder %v148, 0.0
    %vm171 = vcmp.eq.f32.partialorder %v155, 0.0
    %v172 = vsel %vm156, 1, 0
    %v173 = vsel %vm157, 1, 0
    %v174 = vsel %vm158, 1, 0
    %v175 = vsel %vm159, 1, 0
    %v176 = vsel %vm160, 1, 0
    %v177 = vsel %vm161, 1, 0
    %v178 = vsel %vm162, 1, 0
    %v179 = vsel %vm163, 1, 0
    %v180 = vsel %vm164, 1, 0
    %v181 = vsel %vm165, 1, 0
    %v182 = vsel %vm166, 1, 0
    %v183 = vsel %vm167, 1, 0
    %v184 = vsel %vm168, 1, 0
    %v185 = vsel %vm169, 1, 0
    %v186 = vsel %vm170, 1, 0
    %v187 = vsel %vm171, 1, 0
    %vm188 = vcmp.eq.s32.totalorder %v172, 1
    %vm189 = vcmp.eq.s32.totalorder %v173, 1
    %vm190 = vcmp.eq.s32.totalorder %v174, 1
    %vm191 = vcmp.eq.s32.totalorder %v175, 1
    %vm192 = vcmp.eq.s32.totalorder %v176, 1
    %vm193 = vcmp.eq.s32.totalorder %v177, 1
    %vm194 = vcmp.eq.s32.totalorder %v178, 1
    %vm195 = vcmp.eq.s32.totalorder %v179, 1
    %vm196 = vcmp.eq.s32.totalorder %v180, 1
    %vm197 = vcmp.eq.s32.totalorder %v181, 1
    %vm198 = vcmp.eq.s32.totalorder %v182, 1
    %vm199 = vcmp.eq.s32.totalorder %v183, 1
    %vm200 = vcmp.eq.s32.totalorder %v184, 1
    %vm201 = vcmp.eq.s32.totalorder %v185, 1
    %vm202 = vcmp.eq.s32.totalorder %v186, 1
    %vm203 = vcmp.eq.s32.totalorder %v187, 1
    %v204 = vsel %vm188, -1000000.0, %v26
    %v205 = vsel %vm189, -1000000.0, %v27
    %v206 = vsel %vm190, -1000000.0, %v28
    %v207 = vsel %vm191, -1000000.0, %v29
    %v208 = vsel %vm192, -1000000.0, %v30
    %v209 = vsel %vm193, -1000000.0, %v31
    %v210 = vsel %vm194, -1000000.0, %v32
    %v211 = vsel %vm195, -1000000.0, %v33
    %v212 = vsel %vm196, -1000000.0, %v34
    %v213 = vsel %vm197, -1000000.0, %v35
    %v214 = vsel %vm198, -1000000.0, %v36
    %v215 = vsel %vm199, -1000000.0, %v37
    %v216 = vsel %vm200, -1000000.0, %v38
    %v217 = vsel %vm201, -1000000.0, %v39
    %v218 = vsel %vm202, -1000000.0, %v40
    %v219 = vsel %vm203, -1000000.0, %v41
    %v220 = vrot.slane %v204, 4
    %v221 = vmax.f32 %v204, %v220
    %v222 = vrot.slane %v221, 2
    %v223 = vmax.f32 %v221, %v222
    %v224 = vrot.slane %v223, 1
    %v225 = vmax.f32 %v223, %v224
    %v226 = vrot.slane %v205, 4
    %v227 = vmax.f32 %v205, %v226
    %v228 = vrot.slane %v227, 2
    %v229 = vmax.f32 %v227, %v228
    %v230 = vrot.slane %v229, 1
    %v231 = vmax.f32 %v229, %v230
    %v232 = vrot.slane %v206, 4
    %v233 = vmax.f32 %v206, %v232
    %v234 = vrot.slane %v233, 2
    %v235 = vmax.f32 %v233, %v234
    %v236 = vrot.slane %v235, 1
    %v237 = vmax.f32 %v235, %v236
    %v238 = vrot.slane %v207, 4
    %v239 = vmax.f32 %v207, %v238
    %v240 = vrot.slane %v239, 2
    %v241 = vmax.f32 %v239, %v240
    %v242 = vrot.slane %v241, 1
    %v243 = vmax.f32 %v241, %v242
    %v244 = vrot.slane %v208, 4
    %v245 = vmax.f32 %v208, %v244
    %v246 = vrot.slane %v245, 2
    %v247 = vmax.f32 %v245, %v246
    %v248 = vrot.slane %v247, 1
    %v249 = vmax.f32 %v247, %v248
    %v250 = vrot.slane %v209, 4
    %v251 = vmax.f32 %v209, %v250
    %v252 = vrot.slane %v251, 2
    %v253 = vmax.f32 %v251, %v252
    %v254 = vrot.slane %v253, 1
    %v255 = vmax.f32 %v253, %v254
    %v256 = vrot.slane %v210, 4
    %v257 = vmax.f32 %v210, %v256
    %v258 = vrot.slane %v257, 2
    %v259 = vmax.f32 %v257, %v258
    %v260 = vrot.slane %v259, 1
    %v261 = vmax.f32 %v259, %v260
    %v262 = vrot.slane %v211, 4
    %v263 = vmax.f32 %v211, %v262
    %v264 = vrot.slane %v263, 2
    %v265 = vmax.f32 %v263, %v264
    %v266 = vrot.slane %v265, 1
    %v267 = vmax.f32 %v265, %v266
    %v268 = vrot.slane %v212, 4
    %v269 = vmax.f32 %v212, %v268
    %v270 = vrot.slane %v269, 2
    %v271 = vmax.f32 %v269, %v270
    %v272 = vrot.slane %v271, 1
    %v273 = vmax.f32 %v271, %v272
    %v274 = vrot.slane %v213, 4
    %v275 = vmax.f32 %v213, %v274
    %v276 = vrot.slane %v275, 2
    %v277 = vmax.f32 %v275, %v276
    %v278 = vrot.slane %v277, 1
    %v279 = vmax.f32 %v277, %v278
    %v280 = vrot.slane %v214, 4
    %v281 = vmax.f32 %v214, %v280
    %v282 = vrot.slane %v281, 2
    %v283 = vmax.f32 %v281, %v282
    %v284 = vrot.slane %v283, 1
    %v285 = vmax.f32 %v283, %v284
    %v286 = vrot.slane %v215, 4
    %v287 = vmax.f32 %v215, %v286
    %v288 = vrot.slane %v287, 2
    %v289 = vmax.f32 %v287, %v288
    %v290 = vrot.slane %v289, 1
    %v291 = vmax.f32 %v289, %v290
    %v292 = vrot.slane %v216, 4
    %v293 = vmax.f32 %v216, %v292
    %v294 = vrot.slane %v293, 2
    %v295 = vmax.f32 %v293, %v294
    %v296 = vrot.slane %v295, 1
    %v297 = vmax.f32 %v295, %v296
    %v298 = vrot.slane %v217, 4
    %v299 = vmax.f32 %v217, %v298
    %v300 = vrot.slane %v299, 2
    %v301 = vmax.f32 %v299, %v300
    %v302 = vrot.slane %v301, 1
    %v303 = vmax.f32 %v301, %v302
    %v304 = vrot.slane %v218, 4
    %v305 = vmax.f32 %v218, %v304
    %v306 = vrot.slane %v305, 2
    %v307 = vmax.f32 %v305, %v306
    %v308 = vrot.slane %v307, 1
    %v309 = vmax.f32 %v307, %v308
    %v310 = vrot.slane %v219, 4
    %v311 = vmax.f32 %v219, %v310
    %v312 = vrot.slane %v311, 2
    %v313 = vmax.f32 %v311, %v312
    %v314 = vrot.slane %v313, 1
    %v315 = vmax.f32 %v313, %v314
    %vm316 = vcmp.eq.f32.partialorder %v225, -1000000.0
    %vm317 = vcmp.eq.f32.partialorder %v231, -1000000.0
    %vm318 = vcmp.eq.f32.partialorder %v237, -1000000.0
    %vm319 = vcmp.eq.f32.partialorder %v243, -1000000.0
    %vm320 = vcmp.eq.f32.partialorder %v249, -1000000.0
    %vm321 = vcmp.eq.f32.partialorder %v255, -1000000.0
    %vm322 = vcmp.eq.f32.partialorder %v261, -1000000.0
    %vm323 = vcmp.eq.f32.partialorder %v267, -1000000.0
    %vm324 = vcmp.eq.f32.partialorder %v273, -1000000.0
    %vm325 = vcmp.eq.f32.partialorder %v279, -1000000.0
    %vm326 = vcmp.eq.f32.partialorder %v285, -1000000.0
    %vm327 = vcmp.eq.f32.partialorder %v291, -1000000.0
    %vm328 = vcmp.eq.f32.partialorder %v297, -1000000.0
    %vm329 = vcmp.eq.f32.partialorder %v303, -1000000.0
    %vm330 = vcmp.eq.f32.partialorder %v309, -1000000.0
    %vm331 = vcmp.eq.f32.partialorder %v315, -1000000.0
    %v332 = vsel %vm316, 0.0, %v225
    %v333 = vsel %vm317, 0.0, %v231
    %v334 = vsel %vm318, 0.0, %v237
    %v335 = vsel %vm319, 0.0, %v243
    %v336 = vsel %vm320, 0.0, %v249
    %v337 = vsel %vm321, 0.0, %v255
    %v338 = vsel %vm322, 0.0, %v261
    %v339 = vsel %vm323, 0.0, %v267
    %v340 = vsel %vm324, 0.0, %v273
    %v341 = vsel %vm325, 0.0, %v279
    %v342 = vsel %vm326, 0.0, %v285
    %v343 = vsel %vm327, 0.0, %v291
    %v344 = vsel %vm328, 0.0, %v297
    %v345 = vsel %vm329, 0.0, %v303
    %v346 = vsel %vm330, 0.0, %v309
    %v347 = vsel %vm331, 0.0, %v315
    %vm364 = vcmask 1041409
    %v365 = vsel %vm364, %v333, %v332
    %vm366 = vcmask 1042434
    %v367 = vsel %vm366, %v334, %v365
    %vm368 = vcmask 1043459
    %v369 = vsel %vm368, %v335, %v367
    %vm370 = vcmask 1044484
    %v371 = vsel %vm370, %v336, %v369
    %vm372 = vcmask 1045509
    %v373 = vsel %vm372, %v337, %v371
    %vm374 = vcmask 1046534
    %v375 = vsel %vm374, %v338, %v373
    %vm376 = vcmask 1047559
    %v377 = vsel %vm376, %v339, %v375
    %v378 = vsel %vm364, %v341, %v340
    %v379 = vsel %vm366, %v342, %v378
    %v380 = vsel %vm368, %v343, %v379
    %v381 = vsel %vm370, %v344, %v380
    %v382 = vsel %vm372, %v345, %v381
    %v383 = vsel %vm374, %v346, %v382
    %v384 = vsel %vm376, %v347, %v383
    %387 = vst [vmem:[#allocation5] sm:$0xff] %v377
    %388 = vst [vmem:[#allocation5 + $0x8] sm:$0xff] %v384
    // Predicated region
    $region14: #{tpu_custom_call.1} parent=1 // pred_check
      _
    $region15: #{tpu_custom_call.1} parent=1 // pred_check_branch
      %390 = sbr.rel (0) target = $region17
    $region16: #{tpu_custom_call.1} parent=1 // pred_region
      %s392 = ssub.s32 256, 256
      %393 = vsyncadd [#allocation4], %s392
      %s394 = sshll.u32 [#allocation5], 4
      %s395 = int_to_ptr.vmem [resolvable:$true] %s394
      %400 = dma.vmem_to_hbm [thread:$0]  %s395, 256, %s2, [#allocation4], 128, 128, 8
    $region17: #{tpu_custom_call.1} parent=1 // pred_fallthru
      _
    // Predicated region
    $region18: #{tpu_custom_call.1} parent=1 // pred_check
      _
    $region19: #{tpu_custom_call.1} parent=1 // pred_check_branch
      %402 = sbr.rel (0) target = $region21
    $region20: #{tpu_custom_call.1} parent=1 // pred_region
      %403 = dma.done [#allocation4], 256
    $region21: #{tpu_custom_call.1} parent=1 // pred_fallthru
      _
    %404 = vsyncpa [#allocation3], 1
    %405 = vsyncpa [#allocation4], 1

</llo_original>
